<compile_context>
chip_gen: v7x
topology: tpu7x:2x2x1
jax: 0.10.0
libtpu: 0.0.40
codegen_flags: <defaults>
</compile_context>

<pallas_src>
import jax
import jax.numpy as jnp
import numpy as np
from jax.experimental import pallas as pl
from jax.experimental.pallas import tpu as pltpu


def _rltv_embed_kernel(x_ref, w_ref, o_ref):
    # x_ref: (B, L, C_in)   w_ref: (3*C_in, D)   o_ref: (B*L, D)
    B, L, C_in = x_ref.shape
    x = x_ref[...]                                   # (B, L, C_in)

    # Circular taps: two batched XLU sublane rotates (axis=1 is the sublane axis).
    x_prev = pltpu.roll(x, shift=1, axis=1)          # x[b, (t-1) mod L, :]  -> k=0 tap
    x_next = pltpu.roll(x, shift=L - 1, axis=1)      # x[b, (t+1) mod L, :]  -> k=2 tap

    # Free leading-dim collapse (B, L, C_in) -> (B*L, C_in); no lane-dim concat anywhere.
    x_prev2 = x_prev.reshape(B * L, C_in)
    x_mid2 = x.reshape(B * L, C_in)
    x_next2 = x_next.reshape(B * L, C_in)

    # Three accumulating MXU pushes against static weight-Ref slices.
    # Row offsets 0 / C_in / 2*C_in are 8-sublane aligned (C_in = max_car_num*4 = 16).
    acc = jnp.dot(x_prev2, w_ref[0:C_in, :], preferred_element_type=jnp.float32)
    acc = acc + jnp.dot(x_mid2, w_ref[C_in:2 * C_in, :],
                        preferred_element_type=jnp.float32)
    acc = acc + jnp.dot(x_next2, w_ref[2 * C_in:3 * C_in, :],
                        preferred_element_type=jnp.float32)

    # Single contiguous lane-dense store of the whole output slab.
    o_ref[...] = acc.astype(o_ref.dtype)


def prepare_weight(torch_weight):
    """torch Conv1d weight (d_model, C_in, 3) -> (3*C_in, d_model) matmul layout.

    w_flat[k*C_in + c, o] == torch_weight[o, c, k].
    Call ONCE at parameter-init time (pure layout plumbing on a static parameter).
    At production C_in/d_model, store this as bfloat16 instead (keep f32 accumulation
    in-kernel) for ~2-3x MXU throughput and half the resident VMEM.
    """
    d_model, c_in, k = torch_weight.shape
    return (
        jnp.transpose(torch_weight, (2, 1, 0))       # (3, C_in, d_model)
        .reshape(k * c_in, d_model)
        .astype(jnp.float32)
    )


def rltv_embedding(x, w_flat):
    """x: (B, L, C_in) f32, w_flat: (3*C_in, d_model) from prepare_weight().

    Returns (B, L, d_model) f32.
    """
    B, L, C_in = x.shape
    K3, d_model = w_flat.shape
    assert K3 == 3 * C_in

    # TODO(synk): at production sizes add a "parallel" grid axis over B*L (or d_model)
    # tiles so both v7x TensorCores get work, keep the weight BlockSpec index_map constant
    # along the M axis so W stays resident, pad/tile d_model to a multiple of 128 for
    # unmasked stores, and re-derive the VMEM budget (vmem_limit_bytes) against v7x's
    # 64 MiB.  At these toy shapes a single step is strictly cheaper.
    out_flat = pl.pallas_call(
        _rltv_embed_kernel,
        out_shape=jax.ShapeDtypeStruct((B * L, d_model), jnp.float32),
        grid_spec=pltpu.PrefetchScalarGridSpec(
            num_scalar_prefetch=0,
            grid=(1,),   # single step: whole problem resident in VMEM, one launch
            in_specs=[
                pl.BlockSpec((B, L, C_in), lambda i: (0, 0, 0)),
                pl.BlockSpec((K3, d_model), lambda i: (0, 0)),
            ],
            out_specs=pl.BlockSpec((B * L, d_model), lambda i: (0, 0)),
        ),
        compiler_params=pltpu.CompilerParams(
            dimension_semantics=("arbitrary",)),
    )(x, w_flat)

    return out_flat.reshape(B, L, d_model)   # free contiguous reshape in the wrapper


def _reference(x, torch_weight):
    """Plain-JAX reference of the circular conv (channels-last)."""
    B, L, C_in = x.shape
    d_model = torch_weight.shape[0]
    w = jnp.transpose(torch_weight, (2, 1, 0))           # (3, C_in, d_model)
    out = jnp.zeros((B, L, d_model), jnp.float32)
    for k in range(3):
        x_shift = jnp.roll(x, shift=1 - k, axis=1)        # x[b, (t + k - 1) mod L, c]
        out = out + jnp.einsum("blc,cd->bld", x_shift, w[k])
    return out


if __name__ == "__main__":
    # config: max_car_num=4 -> C_in = 16, d_model = 32, batch=2, seq len=8
    B, L = 2, 8
    max_car_num, d_model = 4, 32
    C_in = max_car_num * 4

    key = jax.random.PRNGKey(0)
    kx, kw = jax.random.split(key)
    x = jax.random.normal(kx, (B, L, C_in), dtype=jnp.float32)
    # torch Conv1d weight shape: (out_channels, in_channels, kernel_size)
    weight = jax.random.normal(kw, (d_model, C_in, 3), dtype=jnp.float32) * 0.1

    w_flat = prepare_weight(weight)          # hoisted, param-init-time layout transform
    out = rltv_embedding(x, w_flat)
    out = jax.block_until_ready(out)

    ref = _reference(x, weight)
    assert out.shape == (B, L, d_model)
    np.testing.assert_allclose(np.asarray(out), np.asarray(ref), rtol=1e-4, atol=1e-5)

    print("KERNEL_OK")
</pallas_src>

<mosaic_0001>
module attributes {stable_mosaic.version = 11 : i64} {
  func.func @_rltv_embed_kernel(%arg0: i32, %arg1: memref<2x8x16xf32, #tpu.memory_space<vmem>>, %arg2: memref<48x32xf32, #tpu.memory_space<vmem>>, %arg3: memref<16x32xf32, #tpu.memory_space<vmem>>) attributes {dimension_semantics = [#tpu.dimension_semantics<arbitrary>], iteration_bounds = array<i64: 1>, scalar_prefetch = 0 : i64, scratch_operands = 0 : i64, tpu.core_type = #tpu.core_type<tc>, window_params = [{pipeline_mode = #tpu.pipeline_mode<synchronous>, transform_indices = @transform_0, window_bounds = array<i64: 2, 8, 16>}, {pipeline_mode = #tpu.pipeline_mode<synchronous>, transform_indices = @transform_1, window_bounds = array<i64: 48, 32>}, {pipeline_mode = #tpu.pipeline_mode<synchronous>, transform_indices = @transform_2, window_bounds = array<i64: 16, 32>}]} {
    %c0 = arith.constant 0 : index
    %c0_0 = arith.constant 0 : index
    %c0_1 = arith.constant 0 : index
    %0 = vector.load %arg1[%c0, %c0_0, %c0_1] : memref<2x8x16xf32, #tpu.memory_space<vmem>>, vector<2x8x16xf32>
    %c1_i32 = arith.constant 1 : i32
    %1 = tpu.dynamic_rotate %0 by %c1_i32 dim 1 : vector<2x8x16xf32>, i32 -> vector<2x8x16xf32>
    %c7_i32 = arith.constant 7 : i32
    %2 = tpu.dynamic_rotate %0 by %c7_i32 dim 1 : vector<2x8x16xf32>, i32 -> vector<2x8x16xf32>
    %3 = vector.shape_cast %1 : vector<2x8x16xf32> to vector<16x16xf32>
    %4 = vector.shape_cast %0 : vector<2x8x16xf32> to vector<16x16xf32>
    %5 = vector.shape_cast %2 : vector<2x8x16xf32> to vector<16x16xf32>
    %c0_2 = arith.constant 0 : index
    %c0_3 = arith.constant 0 : index
    %6 = vector.load %arg2[%c0_2, %c0_3] : memref<48x32xf32, #tpu.memory_space<vmem>>, vector<16x32xf32>
    %cst = arith.constant dense<0.000000e+00> : vector<16x32xf32>
    %7 = tpu.matmul %3, %6, %cst {dimension_numbers = #tpu.dot_dimension_numbers<[1], [0], [0], [1], [0, 0, 1, 1], [], []>} : vector<16x16xf32>, vector<16x32xf32>, vector<16x32xf32> -> vector<16x32xf32>
    %c16 = arith.constant 16 : index
    %c0_4 = arith.constant 0 : index
    %8 = vector.load %arg2[%c16, %c0_4] : memref<48x32xf32, #tpu.memory_space<vmem>>, vector<16x32xf32>
    %cst_5 = arith.constant dense<0.000000e+00> : vector<16x32xf32>
    %9 = tpu.matmul %4, %8, %cst_5 {dimension_numbers = #tpu.dot_dimension_numbers<[1], [0], [0], [1], [0, 0, 1, 1], [], []>} : vector<16x16xf32>, vector<16x32xf32>, vector<16x32xf32> -> vector<16x32xf32>
    %10 = arith.addf %7, %9 : vector<16x32xf32>
    %c32 = arith.constant 32 : index
    %c0_6 = arith.constant 0 : index
    %11 = vector.load %arg2[%c32, %c0_6] : memref<48x32xf32, #tpu.memory_space<vmem>>, vector<16x32xf32>
    %cst_7 = arith.constant dense<0.000000e+00> : vector<16x32xf32>
    %12 = tpu.matmul %5, %11, %cst_7 {dimension_numbers = #tpu.dot_dimension_numbers<[1], [0], [0], [1], [0, 0, 1, 1], [], []>} : vector<16x16xf32>, vector<16x32xf32>, vector<16x32xf32> -> vector<16x32xf32>
    %13 = arith.addf %10, %12 : vector<16x32xf32>
    %c0_8 = arith.constant 0 : index
    %c0_9 = arith.constant 0 : index
    %14 = vector.load %arg3[%c0_8, %c0_9] : memref<16x32xf32, #tpu.memory_space<vmem>>, vector<16x32xf32>
    tpu.vector_store %arg3[%c0_8, %c0_9], %13 {strides = array<i32>} : memref<16x32xf32, #tpu.memory_space<vmem>>, vector<16x32xf32>,
    return
  }
  func.func @transform_0(%arg0: i32) -> (i32, i32, i32) {
    %c0_i32 = arith.constant 0 : i32
    %c0_i32_0 = arith.constant 0 : i32
    %c0_i32_1 = arith.constant 0 : i32
    %c0_i32_2 = arith.constant 0 : i32
    return %c0_i32, %c0_i32_0, %c0_i32_1 : i32, i32, i32
  }
  func.func @transform_1(%arg0: i32) -> (i32, i32) {
    %c0_i32 = arith.constant 0 : i32
    %c0_i32_0 = arith.constant 0 : i32
    %c0_i32_1 = arith.constant 0 : i32
    return %c0_i32, %c0_i32_0 : i32, i32
  }
  func.func @transform_2(%arg0: i32) -> (i32, i32) {
    %c0_i32 = arith.constant 0 : i32
    %c0_i32_0 = arith.constant 0 : i32
    %c0_i32_1 = arith.constant 0 : i32
    return %c0_i32, %c0_i32_0 : i32, i32
  }
}

</mosaic_0001>

<llo_original>
// kernel: tpu_custom_call.1
$region0: #{tpu_custom_call.1}
  #allocation0 [shape = 'u32[]', space=smem, size = 0x4, offset = 0x4, fixed_abs, tag = 'smem constant byte address 0x4 - core index']
  #allocation1 [shape = 'u32[144,128]{1,0:T(1,128)}', space=vmem, size = 0x12000, scoped, tag = 'internal scratch']
  %s0 = inlined_call_operand.vmem [shape: f32[2,8,16], index: 0, kind: input, shape index: {}]
  %s1 = inlined_call_operand.vmem [shape: f32[48,32], index: 1, kind: input, shape index: {}]
  %s2 = inlined_call_operand.hbm [shape: f32[16,32], index: 2, kind: output, shape index: {}]
  %s3 = sld [smem:[#allocation0]]
  $region18: #{tpu_custom_call.1} parent=0
    _
  %s5 = ssub.s32 1, %s3
  %s6 = scalar_select 0, %s5, %s3
  $region1: #{tpu_custom_call.1} parent=0
    #allocation2 [shape = 'u8[8192]{0}', space=vmem, size = 0x2000, scoped, tag = 'output window, operand 0, single buffered']
    #allocation3 [shape = 's32[1]{0}', space=sflag, size = 0x4, scoped, tag = 'scoped memory for tpu_custom_call.1']
    %7 = vsyncpa [#allocation3], 0
    // Predicated region
    $region2: #{tpu_custom_call.1} parent=1 // pred_check
      _
    $region3: #{tpu_custom_call.1} parent=1 // pred_check_branch
      %9 = sbr.rel (0) target = $region5
    $region4: #{tpu_custom_call.1} parent=1 // pred_region
      _
    $region5: #{tpu_custom_call.1} parent=1 // pred_fallthru
      _
    // Predicated region
    $region6: #{tpu_custom_call.1} parent=1 // pred_check
      _
    $region7: #{tpu_custom_call.1} parent=1 // pred_check_branch
      %11 = sbr.rel (0) target = $region9
    $region8: #{tpu_custom_call.1} parent=1 // pred_region
      _
    $region9: #{tpu_custom_call.1} parent=1 // pred_fallthru
      _
    %v12 = vld [vmem:[%s0] sm:$0xff]
    %v13 = vld [vmem:[%s0 + $0x8] sm:$0xff]
    %v14 = vrot.slane %v12, 7
    %v15 = vrot.slane %v13, 7
    %v16 = vrot.slane %v12, 1
    %v17 = vrot.slane %v13, 1
    %v18 = vld [vmem:[%s1] sm:$0xff]
    %v19 = vld [vmem:[%s1 + $0x8] sm:$0xff]
    %v20 = vld [vmem:[%s1 + $0x10] sm:$0xff]
    %v21 = vld [vmem:[%s1 + $0x18] sm:$0xff]
    %vm22 = vcmask 130048
    %v24 = vsel %vm22, %v12, 0
    %v27 = vsel %vm22, %v13, 0
    %29 = vmatprep.subr.mxu0 0.0
    %30 = vmatpush1.msra.mxu0 %v20
    %31 = vmatprep.subr.mxu0 0.0
    %32 = vmatpush1.msra.mxu0 %v21
    %33 = vmatprep.subr.mxu0 0.0
    %34 = vmatpush1.msra.mxu0 0.0
    %35 = vmatprep.subr.mxu0 0.0
    %36 = vmatpush1.msra.mxu0 0.0
    %37 = vmatprep.subr.mxu0 0.0
    %38 = vmatpush1.msra.mxu0 0.0
    %39 = vmatprep.subr.mxu0 0.0
    %40 = vmatpush1.msra.mxu0 0.0
    %41 = vmatprep.subr.mxu0 0.0
    %42 = vmatpush1.msra.mxu0 0.0
    %43 = vmatprep.subr.mxu0 0.0
    %44 = vmatpush1.msra.mxu0 0.0
    %45 = vmatprep.subr.mxu0 0.0
    %46 = vmatpush1.msra.mxu0 0.0
    %47 = vmatprep.subr.mxu0 0.0
    %48 = vmatpush1.msra.mxu0 0.0
    %49 = vmatprep.subr.mxu0 0.0
    %50 = vmatpush1.msra.mxu0 0.0
    %51 = vmatprep.subr.mxu0 0.0
    %52 = vmatpush1.msra.mxu0 0.0
    %53 = vmatprep.subr.mxu0 0.0
    %54 = vmatpush1.msra.mxu0 0.0
    %55 = vmatprep.subr.mxu0 0.0
    %56 = vmatpush1.msra.mxu0 0.0
    %57 = vmatprep.subr.mxu0 0.0
    %58 = vmatpush1.msra.mxu0 0.0
    %59 = vmatprep.subr.mxu0 0.0
    %60 = vmatpush1.msra.mxu0 0.0
    %61 = vmatprep.subr.mxu0 0.0
    %62 = vmatpush1.msra.mxu0 0.0
    %63 = vmatprep.subr.mxu0 0.0
    %64 = vmatpush1.msra.mxu0 0.0
    %65 = vmatprep.subr.mxu0 0.0
    %66 = vmatpush1.msra.mxu0 0.0
    %67 = vmatprep.subr.mxu0 0.0
    %68 = vmatpush1.msra.mxu0 0.0
    %69 = vmatprep.subr.mxu0 0.0
    %70 = vmatpush1.msra.mxu0 0.0
    %71 = vmatprep.subr.mxu0 0.0
    %72 = vmatpush1.msra.mxu0 0.0
    %73 = vmatprep.subr.mxu0 0.0
    %74 = vmatpush1.msra.mxu0 0.0
    %75 = vmatprep.subr.mxu0 0.0
    %76 = vmatpush1.msra.mxu0 0.0
    %77 = vmatprep.subr.mxu0 0.0
    %78 = vmatpush1.msra.mxu0 0.0
    %79 = vmatprep.subr.mxu0 0.0
    %80 = vmatpush1.msra.mxu0 0.0
    %81 = vmatprep.subr.mxu0 0.0
    %82 = vmatpush1.msra.mxu0 0.0
    %83 = vmatprep.subr.mxu0 0.0
    %84 = vmatpush1.msra.mxu0 0.0
    %85 = vmatprep.subr.mxu0 0.0
    %86 = vmatpush1.msra.mxu0 0.0
    %87 = vmatprep.subr.mxu0 0.0
    %88 = vmatpush1.msra.mxu0 0.0
    %89 = vmatprep.subr.mxu0 0.0
    %90 = vmatpush1.msra.mxu0 0.0
    %91 = vmatprep.subr.mxu0 0.0
    %92 = vmatpush1.msra.mxu0 0.0
    %93 = vmatprep.mubr.f32.mxu0 0.0
    %94 = vmatmul.mubr.f32.gmra.mrb[0].mxu0 %v24
    %v95 = vpop.f32.mrb[0].mxu0
    %v96 = vadd.f32 0.0, %v95
    %v97 = vpop.f32.mrb[0].mxu0
    %98 = vmatprep.mubr.f32.mxu0 0.0
    %99 = vmatmul.mubr.f32.gmra.mrb[0].mxu0 %v27
    %v100 = vpop.f32.mrb[0].mxu0
    %v101 = vadd.f32 0.0, %v100
    %v102 = vpop.f32.mrb[0].mxu0
    %103 = vdwg.mxu0
    %v105 = vsel %vm22, %v14, 0
    %v108 = vsel %vm22, %v15, 0
    %110 = vmatprep.subr.mxu0 0.0
    %111 = vmatpush1.msra.mxu0 %v18
    %112 = vmatprep.subr.mxu0 0.0
    %113 = vmatpush1.msra.mxu0 %v19
    %114 = vmatprep.subr.mxu0 0.0
    %115 = vmatpush1.msra.mxu0 0.0
    %116 = vmatprep.subr.mxu0 0.0
    %117 = vmatpush1.msra.mxu0 0.0
    %118 = vmatprep.subr.mxu0 0.0
    %119 = vmatpush1.msra.mxu0 0.0
    %120 = vmatprep.subr.mxu0 0.0
    %121 = vmatpush1.msra.mxu0 0.0
    %122 = vmatprep.subr.mxu0 0.0
    %123 = vmatpush1.msra.mxu0 0.0
    %124 = vmatprep.subr.mxu0 0.0
    %125 = vmatpush1.msra.mxu0 0.0
    %126 = vmatprep.subr.mxu0 0.0
    %127 = vmatpush1.msra.mxu0 0.0
    %128 = vmatprep.subr.mxu0 0.0
    %129 = vmatpush1.msra.mxu0 0.0
    %130 = vmatprep.subr.mxu0 0.0
    %131 = vmatpush1.msra.mxu0 0.0
    %132 = vmatprep.subr.mxu0 0.0
    %133 = vmatpush1.msra.mxu0 0.0
    %134 = vmatprep.subr.mxu0 0.0
    %135 = vmatpush1.msra.mxu0 0.0
    %136 = vmatprep.subr.mxu0 0.0
    %137 = vmatpush1.msra.mxu0 0.0
    %138 = vmatprep.subr.mxu0 0.0
    %139 = vmatpush1.msra.mxu0 0.0
    %140 = vmatprep.subr.mxu0 0.0
    %141 = vmatpush1.msra.mxu0 0.0
    %142 = vmatprep.subr.mxu0 0.0
    %143 = vmatpush1.msra.mxu0 0.0
    %144 = vmatprep.subr.mxu0 0.0
    %145 = vmatpush1.msra.mxu0 0.0
    %146 = vmatprep.subr.mxu0 0.0
    %147 = vmatpush1.msra.mxu0 0.0
    %148 = vmatprep.subr.mxu0 0.0
    %149 = vmatpush1.msra.mxu0 0.0
    %150 = vmatprep.subr.mxu0 0.0
    %151 = vmatpush1.msra.mxu0 0.0
    %152 = vmatprep.subr.mxu0 0.0
    %153 = vmatpush1.msra.mxu0 0.0
    %154 = vmatprep.subr.mxu0 0.0
    %155 = vmatpush1.msra.mxu0 0.0
    %156 = vmatprep.subr.mxu0 0.0
    %157 = vmatpush1.msra.mxu0 0.0
    %158 = vmatprep.subr.mxu0 0.0
    %159 = vmatpush1.msra.mxu0 0.0
    %160 = vmatprep.subr.mxu0 0.0
    %161 = vmatpush1.msra.mxu0 0.0
    %162 = vmatprep.subr.mxu0 0.0
    %163 = vmatpush1.msra.mxu0 0.0
    %164 = vmatprep.subr.mxu0 0.0
    %165 = vmatpush1.msra.mxu0 0.0
    %166 = vmatprep.subr.mxu0 0.0
    %167 = vmatpush1.msra.mxu0 0.0
    %168 = vmatprep.subr.mxu0 0.0
    %169 = vmatpush1.msra.mxu0 0.0
    %170 = vmatprep.subr.mxu0 0.0
    %171 = vmatpush1.msra.mxu0 0.0
    %172 = vmatprep.subr.mxu0 0.0
    %173 = vmatpush1.msra.mxu0 0.0
    %174 = vmatprep.mubr.f32.mxu0 0.0
    %175 = vmatmul.mubr.f32.gmra.mrb[0].mxu0 %v105
    %v176 = vpop.f32.mrb[0].mxu0
    %v177 = vadd.f32 %v96, %v176
    %v178 = vpop.f32.mrb[0].mxu0
    %179 = vmatprep.mubr.f32.mxu0 0.0
    %180 = vmatmul.mubr.f32.gmra.mrb[0].mxu0 %v108
    %v181 = vpop.f32.mrb[0].mxu0
    %v182 = vadd.f32 %v101, %v181
    %v183 = vpop.f32.mrb[0].mxu0
    %184 = vdwg.mxu0
    %v185 = vld [vmem:[%s1 + $0x20] sm:$0xff]
    %v186 = vld [vmem:[%s1 + $0x28] sm:$0xff]
    %v188 = vsel %vm22, %v16, 0
    %v191 = vsel %vm22, %v17, 0
    %193 = vmatprep.subr.mxu0 0.0
    %194 = vmatpush1.msra.mxu0 %v185
    %195 = vmatprep.subr.mxu0 0.0
    %196 = vmatpush1.msra.mxu0 %v186
    %197 = vmatprep.subr.mxu0 0.0
    %198 = vmatpush1.msra.mxu0 0.0
    %199 = vmatprep.subr.mxu0 0.0
    %200 = vmatpush1.msra.mxu0 0.0
    %201 = vmatprep.subr.mxu0 0.0
    %202 = vmatpush1.msra.mxu0 0.0
    %203 = vmatprep.subr.mxu0 0.0
    %204 = vmatpush1.msra.mxu0 0.0
    %205 = vmatprep.subr.mxu0 0.0
    %206 = vmatpush1.msra.mxu0 0.0
    %207 = vmatprep.subr.mxu0 0.0
    %208 = vmatpush1.msra.mxu0 0.0
    %209 = vmatprep.subr.mxu0 0.0
    %210 = vmatpush1.msra.mxu0 0.0
    %211 = vmatprep.subr.mxu0 0.0
    %212 = vmatpush1.msra.mxu0 0.0
    %213 = vmatprep.subr.mxu0 0.0
    %214 = vmatpush1.msra.mxu0 0.0
    %215 = vmatprep.subr.mxu0 0.0
    %216 = vmatpush1.msra.mxu0 0.0
    %217 = vmatprep.subr.mxu0 0.0
    %218 = vmatpush1.msra.mxu0 0.0
    %219 = vmatprep.subr.mxu0 0.0
    %220 = vmatpush1.msra.mxu0 0.0
    %221 = vmatprep.subr.mxu0 0.0
    %222 = vmatpush1.msra.mxu0 0.0
    %223 = vmatprep.subr.mxu0 0.0
    %224 = vmatpush1.msra.mxu0 0.0
    %225 = vmatprep.subr.mxu0 0.0
    %226 = vmatpush1.msra.mxu0 0.0
    %227 = vmatprep.subr.mxu0 0.0
    %228 = vmatpush1.msra.mxu0 0.0
    %229 = vmatprep.subr.mxu0 0.0
    %230 = vmatpush1.msra.mxu0 0.0
    %231 = vmatprep.subr.mxu0 0.0
    %232 = vmatpush1.msra.mxu0 0.0
    %233 = vmatprep.subr.mxu0 0.0
    %234 = vmatpush1.msra.mxu0 0.0
    %235 = vmatprep.subr.mxu0 0.0
    %236 = vmatpush1.msra.mxu0 0.0
    %237 = vmatprep.subr.mxu0 0.0
    %238 = vmatpush1.msra.mxu0 0.0
    %239 = vmatprep.subr.mxu0 0.0
    %240 = vmatpush1.msra.mxu0 0.0
    %241 = vmatprep.subr.mxu0 0.0
    %242 = vmatpush1.msra.mxu0 0.0
    %243 = vmatprep.subr.mxu0 0.0
    %244 = vmatpush1.msra.mxu0 0.0
    %245 = vmatprep.subr.mxu0 0.0
    %246 = vmatpush1.msra.mxu0 0.0
    %247 = vmatprep.subr.mxu0 0.0
    %248 = vmatpush1.msra.mxu0 0.0
    %249 = vmatprep.subr.mxu0 0.0
    %250 = vmatpush1.msra.mxu0 0.0
    %251 = vmatprep.subr.mxu0 0.0
    %252 = vmatpush1.msra.mxu0 0.0
    %253 = vmatprep.subr.mxu0 0.0
    %254 = vmatpush1.msra.mxu0 0.0
    %255 = vmatprep.subr.mxu0 0.0
    %256 = vmatpush1.msra.mxu0 0.0
    %257 = vmatprep.mubr.f32.mxu0 0.0
    %258 = vmatmul.mubr.f32.gmra.mrb[0].mxu0 %v188
    %v259 = vpop.f32.mrb[0].mxu0
    %v260 = vadd.f32 0.0, %v259
    %v261 = vpop.f32.mrb[0].mxu0
    %262 = vmatprep.mubr.f32.mxu0 0.0
    %263 = vmatmul.mubr.f32.gmra.mrb[0].mxu0 %v191
    %v264 = vpop.f32.mrb[0].mxu0
    %v265 = vadd.f32 0.0, %v264
    %v266 = vpop.f32.mrb[0].mxu0
    %267 = vdwg.mxu0
    %v268 = vadd.f32 %v177, %v260
    %v269 = vadd.f32 %v182, %v265
    %vm270 = vcmask 261120
    %271 = vst.msk [vmem:[#allocation2] sm:$0xff] %vm270, %v268
    %272 = vst.msk [vmem:[#allocation2 + $0x8] sm:$0xff] %vm270, %v269
    // Predicated region
    $region10: #{tpu_custom_call.1} parent=1 // pred_check
      _
    $region11: #{tpu_custom_call.1} parent=1 // pred_check_branch
      %274 = sbr.rel (0) target = $region13
    $region12: #{tpu_custom_call.1} parent=1 // pred_region
      %s276 = ssub.s32 256, 256
      %277 = vsyncadd [#allocation3], %s276
      %s278 = sshll.u32 [#allocation2], 4
      %s279 = int_to_ptr.vmem [resolvable:$true] %s278
      %284 = dma.vmem_to_hbm [thread:$0]  %s279, 256, %s2, [#allocation3], 128, 128, 8
    $region13: #{tpu_custom_call.1} parent=1 // pred_fallthru
      _
    // Predicated region
    $region14: #{tpu_custom_call.1} parent=1 // pred_check
      _
    $region15: #{tpu_custom_call.1} parent=1 // pred_check_branch
      %286 = sbr.rel (0) target = $region17
    $region16: #{tpu_custom_call.1} parent=1 // pred_region
      %287 = dma.done [#allocation3], 256
    $region17: #{tpu_custom_call.1} parent=1 // pred_fallthru
      _
    %288 = vsyncpa [#allocation3], 1

</llo_original>
